<compile_context>
chip_gen: v5e
topology: v5e:2x2
jax: 0.10.0
libtpu: 0.0.40
codegen_flags: <defaults>
</compile_context>

<pallas_src>
import functools

import jax
import jax.numpy as jnp
from jax.experimental import pallas as pl
from jax.experimental.pallas import tpu as pltpu


def _fused_mlp_kernel(x_ref, wb_ref, o_ref, *, cin):
    # Single fused linear: y = x @ W + b, with W,b packed into one operand.
    x = x_ref[...]                      # (TM, Cin)
    w = wb_ref[0:cin, :]                # (Cin, Cout)  static slice -> free
    b = wb_ref[cin:cin + 1, :]          # (1,  Cout)
    y = jnp.dot(x, w, preferred_element_type=jnp.float32) + b
    o_ref[...] = y.astype(o_ref.dtype)


def fold_linear_chain(w1, b1, w2, b2, w3, b3, dtype=jnp.float32):
    """Fold three chained torch-style linears (w: (out,in), b: (out,)) into a
    single packed (Cin+1, Cout) operand [W ; b].  Exact up to f32 rounding
    (no nonlinearity between layers).  Done once at weight-load time."""
    w1t, w2t, w3t = w1.T, w2.T, w3.T
    w = (w1t @ w2t) @ w3t                        # (Cin, Cout)
    b = ((b1 @ w2t) + b2) @ w3t + b3             # (Cout,)
    return jnp.concatenate([w, b[None, :]], axis=0).astype(dtype)


def mlp_forward(x, wb, *, tm=8192):
    """x: (B, H, W, Cin); wb: packed (Cin+1, Cout) from fold_linear_chain."""
    B, H, W, Cin = x.shape
    assert wb.shape[0] == Cin + 1
    Cout = wb.shape[1]
    M = B * H * W
    x2d = x.reshape(M, Cin)

    kernel = functools.partial(_fused_mlp_kernel, cin=Cin)
    cost = pl.CostEstimate(
        flops=2 * M * Cin * Cout,
        transcendentals=0,
        bytes_accessed=4 * (M * Cin + (Cin + 1) * Cout + M * Cout),
    )

    if M <= tm:
        # Tiny-M path (covers the reference shape): whole problem in one
        # VMEM block — one invocation, 2 input DMA descriptors.
        out2d = pl.pallas_call(
            kernel,
            out_shape=jax.ShapeDtypeStruct((M, Cout), x.dtype),
            in_specs=[
                pl.BlockSpec(memory_space=pltpu.MemorySpace.VMEM),  # x (M, Cin)
                pl.BlockSpec(memory_space=pltpu.MemorySpace.VMEM),  # [W;b]
            ],
            out_specs=pl.BlockSpec(memory_space=pltpu.MemorySpace.VMEM),
            cost_estimate=cost,
        )(x2d, wb)
    else:
        # Tiled, megacore-parallel path for any large M (cdiv grid: partial
        # last block handled by Pallas, no divisibility requirement on M).
        # VMEM (lane-padded, double-buffered) at tm=8192: ~16–17 MiB.
        out2d = pl.pallas_call(
            kernel,
            out_shape=jax.ShapeDtypeStruct((M, Cout), x.dtype),
            grid=(pl.cdiv(M, tm),),
            in_specs=[
                pl.BlockSpec((tm, Cin), lambda i: (i, 0)),
                pl.BlockSpec((Cin + 1, Cout), lambda i: (0, 0)),
            ],
            out_specs=pl.BlockSpec((tm, Cout), lambda i: (i, 0)),
            compiler_params=pltpu.CompilerParams(
                dimension_semantics=("parallel",),
                vmem_limit_bytes=48 << 20,
            ),
            cost_estimate=cost,
        )(x2d, wb)

    return out2d.reshape(B, H, W, Cout)


def _torch_like_linear_init(key, out_features, in_features, dtype=jnp.float32):
    """Deterministic init matching torch.nn.Linear's U(-1/sqrt(in), 1/sqrt(in))."""
    kw, kb = jax.random.split(key)
    bound = 1.0 / (in_features ** 0.5)
    w = jax.random.uniform(kw, (out_features, in_features), dtype, -bound, bound)
    b = jax.random.uniform(kb, (out_features,), dtype, -bound, bound)
    return w, b


if __name__ == "__main__":
    key = jax.random.PRNGKey(0)
    k_x, k1, k2, k3, k_big = jax.random.split(key, 5)

    # Input consistent with the module: torch.randn(1, 2, 2, 6)
    x1 = jax.random.normal(k_x, (1, 2, 2, 6), dtype=jnp.float32)

    # linear1: 6 -> 4 ; linear2: 4 -> 2 ; linear3: 2 -> 3  (see TODO above)
    w1, b1 = _torch_like_linear_init(k1, 4, 6)
    w2, b2 = _torch_like_linear_init(k2, 2, 4)
    w3, b3 = _torch_like_linear_init(k3, 3, 2)

    # One-time weight prep (folding + packing).
    wb = fold_linear_chain(w1, b1, w2, b2, w3, b3)

    def ref_chain(x):
        # Pure-JAX reference: the UNFUSED F.linear chain (same math as module).
        r = x @ w1.T + b1
        r = r @ w2.T + b2
        r = r @ w3.T + b3
        return r

    # 1) Reference shape -> single-block path.
    out = jax.block_until_ready(mlp_forward(x1, wb))
    assert out.shape == (1, 2, 2, 3)
    assert jnp.allclose(out, ref_chain(x1), atol=1e-4, rtol=1e-4)

    # 2) Larger batch -> tiled megacore path, with M = 12288 NOT a multiple of
    #    tm=8192 to exercise the cdiv grid + partial last block.
    x_big = jax.random.normal(k_big, (4, 48, 64, 6), dtype=jnp.float32)
    out_big = jax.block_until_ready(mlp_forward(x_big, wb, tm=8192))
    assert out_big.shape == (4, 48, 64, 3)
    assert jnp.allclose(out_big, ref_chain(x_big), atol=1e-4, rtol=1e-4)

    print("KERNEL_OK")
</pallas_src>

<mosaic_0001>
module attributes {stable_mosaic.version = 11 : i64} {
  func.func @_fused_mlp_kernel(%arg0: memref<4x6xf32, #tpu.memory_space<vmem>>, %arg1: memref<7x3xf32, #tpu.memory_space<vmem>>, %arg2: memref<4x3xf32, #tpu.memory_space<vmem>>) attributes {dimension_semantics = [], scalar_prefetch = 0 : i64, scratch_operands = 0 : i64, tpu.core_type = #tpu.core_type<tc>} {
    %c0 = arith.constant 0 : index
    %c0_0 = arith.constant 0 : index
    %0 = vector.load %arg0[%c0, %c0_0] : memref<4x6xf32, #tpu.memory_space<vmem>>, vector<4x6xf32>
    %c0_1 = arith.constant 0 : index
    %c0_2 = arith.constant 0 : index
    %1 = vector.load %arg1[%c0_1, %c0_2] : memref<7x3xf32, #tpu.memory_space<vmem>>, vector<6x3xf32>
    %c6 = arith.constant 6 : index
    %c0_3 = arith.constant 0 : index
    %2 = vector.load %arg1[%c6, %c0_3] : memref<7x3xf32, #tpu.memory_space<vmem>>, vector<1x3xf32>
    %cst = arith.constant dense<0.000000e+00> : vector<4x3xf32>
    %3 = tpu.matmul %0, %1, %cst {dimension_numbers = #tpu.dot_dimension_numbers<[1], [0], [0], [1], [0, 0, 1, 1], [], []>} : vector<4x6xf32>, vector<6x3xf32>, vector<4x3xf32> -> vector<4x3xf32>
    %4 = vector.broadcast %2 : vector<1x3xf32> to vector<4x3xf32>
    %5 = arith.addf %3, %4 : vector<4x3xf32>
    %c0_4 = arith.constant 0 : index
    %c0_5 = arith.constant 0 : index
    %6 = vector.load %arg2[%c0_4, %c0_5] : memref<4x3xf32, #tpu.memory_space<vmem>>, vector<4x3xf32>
    tpu.vector_store %arg2[%c0_4, %c0_5], %5 {strides = array<i32>} : memref<4x3xf32, #tpu.memory_space<vmem>>, vector<4x3xf32>,
    return
  }
}

</mosaic_0001>

<llo_original>
// kernel: tpu_custom_call.1
$region0: #{tpu_custom_call.1}
  #allocation0 [shape = 'u32[]', space=smem, size = 0x4, offset = 0x4, fixed_abs, tag = 'smem constant byte address 0x4 - core index']
  #allocation1 [shape = 'u32[72,128]{1,0:T(1,128)}', space=vmem, size = 0x9000, scoped, tag = 'internal scratch']
  %s0 = inlined_call_operand.vmem [shape: f32[4,6], index: 0, kind: input, shape index: {}]
  %s1 = inlined_call_operand.vmem [shape: f32[7,3], index: 1, kind: input, shape index: {}]
  %s2 = inlined_call_operand.hbm [shape: f32[4,3], index: 2, kind: output, shape index: {}]
  %s3 = sld [smem:[#allocation0]]
  $region18: #{tpu_custom_call.1} parent=0
    _
  %s5 = ssub.s32 1, %s3
  %s6 = scalar_select 0, %s5, %s3
  $region1: #{tpu_custom_call.1} parent=0
    #allocation2 [shape = 'u8[2048]{0}', space=vmem, size = 0x800, scoped, tag = 'output window, operand 0, single buffered']
    #allocation3 [shape = 's32[1]{0}', space=sflag, size = 0x4, scoped, tag = 'scoped memory for tpu_custom_call.1']
    %7 = vsyncpa [#allocation3], 0
    // Predicated region
    $region2: #{tpu_custom_call.1} parent=1 // pred_check
      _
    $region3: #{tpu_custom_call.1} parent=1 // pred_check_branch
      %9 = sbr.rel (0) target = $region5
    $region4: #{tpu_custom_call.1} parent=1 // pred_region
      _
    $region5: #{tpu_custom_call.1} parent=1 // pred_fallthru
      _
    // Predicated region
    $region6: #{tpu_custom_call.1} parent=1 // pred_check
      _
    $region7: #{tpu_custom_call.1} parent=1 // pred_check_branch
      %11 = sbr.rel (0) target = $region9
    $region8: #{tpu_custom_call.1} parent=1 // pred_region
      _
    $region9: #{tpu_custom_call.1} parent=1 // pred_fallthru
      _
    %v12 = vld [vmem:[%s0] sm:$0xf]
    %v13 = vld [vmem:[%s1] sm:$0x3f]
    %v14 = vld [vmem:[%s1 + $0x6] sm:$0x1]
    %v15 = vperm.slane %v14, 0
    %vm16 = vcmask 48128
    %v18 = vsel %vm16, %v12, 0
    %vm20 = vcmask 1045504
    %v22 = vsel %vm20, %v13, 0
    %24 = vmatpush.msra.mxu0 0.0
    %25 = vmatpush.msra.mxu0 0.0
    %26 = vmatpush.msra.mxu0 0.0
    %27 = vmatpush.msra.mxu0 0.0
    %28 = vmatpush.msra.mxu0 0.0
    %29 = vmatpush.msra.mxu0 0.0
    %30 = vmatpush.msra.mxu0 0.0
    %31 = vmatpush.msra.mxu0 0.0
    %32 = vmatpush.msra.mxu0 0.0
    %33 = vmatpush.msra.mxu0 0.0
    %34 = vmatpush.msra.mxu0 0.0
    %35 = vmatpush.msra.mxu0 0.0
    %36 = vmatpush.msra.mxu0 0.0
    %37 = vmatpush.msra.mxu0 0.0
    %38 = vmatpush.msra.mxu0 0.0
    %39 = vmatpush.msra.mxu0 %v22
    %40 = vmatmul.f32.gmra.mxu0 %v18
    %v41 = vpop.f32.mrf.mxu0
    %v42 = vadd.f32 %v15, %v41
    %43 = vdwg.mxu0
    %vm44 = vcmask 19456
    %45 = vst.msk [vmem:[#allocation2] sm:$0xf] %vm44, %v42
    // Predicated region
    $region10: #{tpu_custom_call.1} parent=1 // pred_check
      _
    $region11: #{tpu_custom_call.1} parent=1 // pred_check_branch
      %47 = sbr.rel (0) target = $region13
    $region12: #{tpu_custom_call.1} parent=1 // pred_region
      %49 = vsyncadd [#allocation3], 0
      %s51 = sshll.u32 [#allocation2], 4
      %s52 = int_to_ptr.vmem [resolvable:$true] %s51
      %s53 = sshll.u32 %s2, 4
      %s54 = int_to_ptr.hbm [resolvable:$true] %s53
      %56 = dma.vmem_to_hbm [thread:$0]  %s52, 64, %s54, [#allocation3]
    $region13: #{tpu_custom_call.1} parent=1 // pred_fallthru
      _
    // Predicated region
    $region14: #{tpu_custom_call.1} parent=1 // pred_check
      _
    $region15: #{tpu_custom_call.1} parent=1 // pred_check_branch
      %58 = sbr.rel (0) target = $region17
    $region16: #{tpu_custom_call.1} parent=1 // pred_region
      %60 = dma.done [#allocation3], 64
    $region17: #{tpu_custom_call.1} parent=1 // pred_fallthru
      _
    %61 = vsyncpa [#allocation3], 1

</llo_original>
